<compile_context>
chip_gen: v6e
topology: v6e:2x2x1
jax: 0.10.0
libtpu: 0.0.40
codegen_flags: <defaults>
</compile_context>

<pallas_src>
import functools

import jax
import jax.numpy as jnp
from jax import lax
from jax.experimental import pallas as pl
from jax.experimental.pallas import tpu as pltpu

EPS = 1e-5  # default eps of nn.BatchNorm2d / nn.InstanceNorm2d
_LANE = 128


def _round_up(v, m):
    return ((v + m - 1) // m) * m


def _cdiv(a, b):
    return (a + b - 1) // b


def _sublane_for(dtype):
    # 8 sublanes for 32-bit, 16 for bf16, 32 for int8 (packed-layout friendly).
    return max(8, 32 // jnp.dtype(dtype).itemsize)


@functools.lru_cache(maxsize=1)
def _vmem_limit_bytes():
    """Generation-aware scoped-VMEM limit: min(physical/2, 64 MiB)."""
    phys = None
    try:
        info = pltpu.get_tpu_info()
        phys = getattr(info, "vmem_capacity_bytes", None)
    except Exception:
        phys = None
    if not phys:
        phys = 64 * 1024 * 1024  # conservative fallback (safe on v5e..v7x)
    return int(min(phys // 2, 64 * 1024 * 1024))


def _plan_tiles(R, HW, dtype):
    """Pick (row_tile, hw_tile, grid_r, grid_hw, vmem_limit)."""
    sub = _sublane_for(dtype)
    vmem_limit = _vmem_limit_bytes()
    # Budget per block: double-buffered in+out blocks + f32 upcast temps ~= 6-8x
    # one block, so use limit/8.  Footprint is estimated at f32 width (upcast).
    budget = max(vmem_limit // 8, 512 * 1024)
    hw_pad = _round_up(HW, _LANE)          # VMEM layout width per row
    row_bytes_f32 = hw_pad * 4

    if sub * row_bytes_f32 <= budget:
        # Full rows fit: spatial block dim == HW (no HBM padding copies).
        thw = HW
        tr = (budget // row_bytes_f32) // sub * sub
        tr = max(sub, min(tr, _round_up(R, sub)))
        if R >= 2 * sub:                   # keep >=2 row blocks for megacore
            tr = min(tr, _round_up(_cdiv(R, 2), sub))
        tr = max(sub, tr)
    else:
        # Huge rows: tile the spatial axis too (lane-aligned tiles).
        tr = sub
        thw = max(_LANE, (budget // (sub * 4)) // _LANE * _LANE)
        thw = min(thw, hw_pad)

    grid_r = _cdiv(R, tr)
    grid_hw = _cdiv(HW, thw)
    return tr, thw, grid_r, grid_hw, vmem_limit


# ------------------------- Pallas kernels -------------------------

def _in_film_fused_kernel(x_ref, f_ref, b_ref, o_ref, *, inv_hw):
    """InstanceNorm + FiLM, fused.  x block: (TR, HW); f/b blocks: (TR, 1).

    The whole row is VMEM-resident, so variance is computed centered
    (mean first, then sum((x-mean)^2)) for precision at zero extra HBM cost.
    Tail (out-of-bounds) rows of the last grid step read garbage, but every op
    is row-independent and their output rows are discarded on write.
    """
    x = x_ref[...].astype(jnp.float32)
    mean = jnp.sum(x, axis=-1, keepdims=True) * inv_hw
    centered = x - mean
    var = jnp.sum(centered * centered, axis=-1, keepdims=True) * inv_hw
    scale = f_ref[...].astype(jnp.float32) * lax.rsqrt(var + EPS)
    o_ref[...] = (centered * scale + b_ref[...].astype(jnp.float32)).astype(o_ref.dtype)


def _row_stats_kernel(x_ref, s_ref, sq_ref, *, hw_total, thw):
    """Per-row sum / sum-of-squares, accumulated across the hw grid axis."""
    @pl.when(pl.program_id(1) == 0)
    def _():
        s_ref[...] = jnp.zeros_like(s_ref)
        sq_ref[...] = jnp.zeros_like(sq_ref)

    x = x_ref[...].astype(jnp.float32)
    if hw_total % thw != 0:  # static: only the overhanging tail hw block needs masking
        col = pl.program_id(1) * thw + lax.broadcasted_iota(jnp.int32, x.shape, 1)
        x = jnp.where(col < hw_total, x, 0.0)
    s_ref[...] += jnp.sum(x, axis=-1, keepdims=True)
    sq_ref[...] += jnp.sum(x * x, axis=-1, keepdims=True)


def _scale_shift_kernel(x_ref, scale_ref, shift_ref, o_ref):
    """out = x * scale + shift (single multiply-add per element)."""
    x = x_ref[...].astype(jnp.float32)
    o_ref[...] = (x * scale_ref[...] + shift_ref[...]).astype(o_ref.dtype)


# ------------------------- wrapper -------------------------

def _film_forward(x, factor, bias, mode_norm="in"):
    """x: (N, C, H, W); factor, bias: (N, C, 1, 1). Returns (N, C, H, W)."""
    N, C, H, W = x.shape
    HW = H * W
    R = N * C
    itemsize = x.dtype.itemsize

    tr, thw, grid_r, grid_hw, vmem_limit = _plan_tiles(R, HW, x.dtype)

    x2 = x.reshape(R, HW)                       # free reshape, no padding / copies
    f2 = factor.reshape(R, 1).astype(jnp.float32)
    b2 = bias.reshape(R, 1).astype(jnp.float32)

    x_spec_1d = pl.BlockSpec((tr, HW), lambda r: (r, 0))
    vec_spec_1d = pl.BlockSpec((tr, 1), lambda r: (r, 0))
    x_spec = pl.BlockSpec((tr, thw), lambda r, hw: (r, hw))
    vec_spec = pl.BlockSpec((tr, 1), lambda r, hw: (r, 0))
    # If profiling shows exposed DMA on short grids: pipeline_mode=pl.Buffered(3)
    # on x_spec only (not the tiny (tr,1) vec specs).

    if mode_norm == "in" and grid_hw == 1:
        # Single fused pass: 1 read + 1 write of x = HBM floor for instance norm.
        out2 = pl.pallas_call(
            functools.partial(_in_film_fused_kernel, inv_hw=1.0 / HW),
            out_shape=jax.ShapeDtypeStruct((R, HW), x.dtype),
            grid_spec=pltpu.PrefetchScalarGridSpec(
                num_scalar_prefetch=0,
                grid=(grid_r,),
                in_specs=[x_spec_1d, vec_spec_1d, vec_spec_1d],
                out_specs=x_spec_1d),
            compiler_params=pltpu.CompilerParams(
                dimension_semantics=("parallel",),
                vmem_limit_bytes=vmem_limit),
            cost_estimate=pl.CostEstimate(
                flops=6 * R * HW, transcendentals=R,
                bytes_accessed=2 * R * HW * itemsize + 8 * R),
        )(x2, f2, b2)
        return out2.reshape(N, C, H, W)

    if mode_norm not in ("in", "bn"):
        raise ValueError(f"unknown mode_norm: {mode_norm}")

    # ---- two-pass path ('bn' always; 'in' only when HW itself must be tiled) ----
    # Pass 1: per-row sum / sumsq (hw axis is a reduction -> last + "arbitrary").
    s_rows, sq_rows = pl.pallas_call(
        functools.partial(_row_stats_kernel, hw_total=HW, thw=thw),
        out_shape=(jax.ShapeDtypeStruct((R, 1), jnp.float32),
                   jax.ShapeDtypeStruct((R, 1), jnp.float32)),
        grid_spec=pltpu.PrefetchScalarGridSpec(
            num_scalar_prefetch=0,
            grid=(grid_r, grid_hw),
            in_specs=[x_spec],
            out_specs=(vec_spec, vec_spec)),
        compiler_params=pltpu.CompilerParams(
            dimension_semantics=("parallel", "arbitrary"),
            vmem_limit_bytes=vmem_limit),
        cost_estimate=pl.CostEstimate(
            flops=3 * R * HW, transcendentals=0,
            bytes_accessed=R * HW * itemsize + 8 * R),
    )(x2)

    # Tiny glue in plain JAX: fold stats + FiLM params into per-row scale/shift.
    if mode_norm == "in":
        cnt = float(HW)
        mean = s_rows / cnt
        var = jnp.maximum(sq_rows / cnt - mean * mean, 0.0)
        scale = f2 * lax.rsqrt(var + EPS)
        shift = b2 - mean * scale
    else:  # 'bn'
        # TODO(synk): training-mode batch statistics only (biased batch variance,
        # no running_mean/running_var tracking), matching torch BatchNorm2d in train().
        cnt = float(N * HW)
        s_c = jnp.sum(s_rows.reshape(N, C), axis=0)
        sq_c = jnp.sum(sq_rows.reshape(N, C), axis=0)
        mean_c = s_c / cnt
        var_c = jnp.maximum(sq_c / cnt - mean_c * mean_c, 0.0)
        inv_std_c = lax.rsqrt(var_c + EPS)                      # (C,)
        scale_nc = f2.reshape(N, C) * inv_std_c[None, :]
        shift_nc = b2.reshape(N, C) - mean_c[None, :] * scale_nc
        scale = scale_nc.reshape(R, 1)
        shift = shift_nc.reshape(R, 1)

    # Pass 2: out = x * scale + shift.
    out2 = pl.pallas_call(
        _scale_shift_kernel,
        out_shape=jax.ShapeDtypeStruct((R, HW), x.dtype),
        grid_spec=pltpu.PrefetchScalarGridSpec(
            num_scalar_prefetch=0,
            grid=(grid_r, grid_hw),
            in_specs=[x_spec, vec_spec, vec_spec],
            out_specs=x_spec),
        compiler_params=pltpu.CompilerParams(
            dimension_semantics=("parallel", "parallel"),
            vmem_limit_bytes=vmem_limit),
        cost_estimate=pl.CostEstimate(
            flops=2 * R * HW, transcendentals=0,
            bytes_accessed=2 * R * HW * itemsize + 8 * R),
    )(x2, scale, shift)
    return out2.reshape(N, C, H, W)


film_forward = jax.jit(_film_forward, static_argnames=("mode_norm",))


# ------------------------- reference (plain JAX) -------------------------

def film_forward_ref(x, factor, bias, mode_norm="in"):
    axes = (2, 3) if mode_norm == "in" else (0, 2, 3)
    mean = jnp.mean(x, axis=axes, keepdims=True)
    var = jnp.mean((x - mean) ** 2, axis=axes, keepdims=True)
    normalized = (x - mean) / jnp.sqrt(var + EPS)
    # factor_binary = where(factor>0, 1, 0) is unused in the torch forward -> omitted.
    return normalized * factor + bias


# ------------------------- main -------------------------

if __name__ == "__main__":
    key = jax.random.PRNGKey(0)
    ok = True
    # (2,4,16,16): lane-aligned HW; (2,4,7,7): exercises the non-128-multiple HW path
    # (masked stores, no HBM padding copies).
    for (N, C, H, W) in [(2, 4, 16, 16), (2, 4, 7, 7)]:
        k1, k2, k3 = jax.random.split(jax.random.fold_in(key, H), 3)
        x = jax.random.normal(k1, (N, C, H, W), dtype=jnp.float32)
        factor = jax.random.normal(k2, (N, C, 1, 1), dtype=jnp.float32)
        bias = jax.random.normal(k3, (N, C, 1, 1), dtype=jnp.float32)
        for mode in ("in", "bn"):
            out = jax.block_until_ready(
                film_forward(x, factor, bias, mode_norm=mode))
            ref = film_forward_ref(x, factor, bias, mode_norm=mode)
            if not jnp.allclose(out, ref, atol=1e-4, rtol=1e-4):
                ok = False
                err = float(jnp.max(jnp.abs(out - ref)))
                print(f"mismatch shape={(N, C, H, W)} mode={mode}: max err {err}")
    if ok:
        print("KERNEL_OK")
</pallas_src>

<mosaic_0001>
module attributes {stable_mosaic.version = 11 : i64} {
  func.func @_in_film_fused_kernel(%arg0: i32, %arg1: memref<8x256xf32, #tpu.memory_space<vmem>>, %arg2: memref<8x1xf32, #tpu.memory_space<vmem>>, %arg3: memref<8x1xf32, #tpu.memory_space<vmem>>, %arg4: memref<8x256xf32, #tpu.memory_space<vmem>>) attributes {dimension_semantics = [#tpu.dimension_semantics<parallel>], iteration_bounds = array<i64: 1>, scalar_prefetch = 0 : i64, scratch_operands = 0 : i64, tpu.core_type = #tpu.core_type<tc>, window_params = [{transform_indices = @transform_0, window_bounds = array<i64: 8, 256>}, {transform_indices = @transform_1, window_bounds = array<i64: 8, 1>}, {transform_indices = @transform_2, window_bounds = array<i64: 8, 1>}, {transform_indices = @transform_3, window_bounds = array<i64: 8, 256>}]} {
    %c0 = arith.constant 0 : index
    %c0_0 = arith.constant 0 : index
    %0 = vector.load %arg1[%c0, %c0_0] : memref<8x256xf32, #tpu.memory_space<vmem>>, vector<8x256xf32>
    %cst = arith.constant dense<0.000000e+00> : vector<8xf32>
    %1 = vector.multi_reduction <add>, %0, %cst [1] : vector<8x256xf32> to vector<8xf32>
    %2 = vector.shape_cast %1 : vector<8xf32> to vector<8x1xf32>
    %cst_1 = arith.constant 3.906250e-03 : f32
    %3 = vector.broadcast %cst_1 : f32 to vector<8x1xf32>
    %4 = arith.mulf %2, %3 : vector<8x1xf32>
    %5 = vector.broadcast %4 : vector<8x1xf32> to vector<8x256xf32>
    %6 = arith.subf %0, %5 : vector<8x256xf32>
    %7 = arith.mulf %6, %6 : vector<8x256xf32>
    %cst_2 = arith.constant dense<0.000000e+00> : vector<8xf32>
    %8 = vector.multi_reduction <add>, %7, %cst_2 [1] : vector<8x256xf32> to vector<8xf32>
    %9 = vector.shape_cast %8 : vector<8xf32> to vector<8x1xf32>
    %cst_3 = arith.constant 3.906250e-03 : f32
    %10 = vector.broadcast %cst_3 : f32 to vector<8x1xf32>
    %11 = arith.mulf %9, %10 : vector<8x1xf32>
    %c0_4 = arith.constant 0 : index
    %c0_5 = arith.constant 0 : index
    %12 = vector.load %arg2[%c0_4, %c0_5] : memref<8x1xf32, #tpu.memory_space<vmem>>, vector<8x1xf32>
    %cst_6 = arith.constant 9.99999974E-6 : f32
    %13 = vector.broadcast %cst_6 : f32 to vector<8x1xf32>
    %14 = arith.addf %11, %13 : vector<8x1xf32>
    %15 = math.rsqrt %14 : vector<8x1xf32>
    %16 = arith.mulf %12, %15 : vector<8x1xf32>
    %17 = vector.broadcast %16 : vector<8x1xf32> to vector<8x256xf32>
    %18 = arith.mulf %6, %17 : vector<8x256xf32>
    %c0_7 = arith.constant 0 : index
    %c0_8 = arith.constant 0 : index
    %19 = vector.load %arg3[%c0_7, %c0_8] : memref<8x1xf32, #tpu.memory_space<vmem>>, vector<8x1xf32>
    %20 = vector.broadcast %19 : vector<8x1xf32> to vector<8x256xf32>
    %21 = arith.addf %18, %20 : vector<8x256xf32>
    %c0_9 = arith.constant 0 : index
    %c0_10 = arith.constant 0 : index
    %22 = vector.load %arg4[%c0_9, %c0_10] : memref<8x256xf32, #tpu.memory_space<vmem>>, vector<8x256xf32>
    tpu.vector_store %arg4[%c0_9, %c0_10], %21 {strides = array<i32>} : memref<8x256xf32, #tpu.memory_space<vmem>>, vector<8x256xf32>,
    return
  }
  func.func @transform_0(%arg0: i32) -> (i32, i32) {
    %c0_i32 = arith.constant 0 : i32
    %c0_i32_0 = arith.constant 0 : i32
    return %arg0, %c0_i32 : i32, i32
  }
  func.func @transform_1(%arg0: i32) -> (i32, i32) {
    %c0_i32 = arith.constant 0 : i32
    %c0_i32_0 = arith.constant 0 : i32
    return %arg0, %c0_i32 : i32, i32
  }
  func.func @transform_2(%arg0: i32) -> (i32, i32) {
    %c0_i32 = arith.constant 0 : i32
    %c0_i32_0 = arith.constant 0 : i32
    return %arg0, %c0_i32 : i32, i32
  }
  func.func @transform_3(%arg0: i32) -> (i32, i32) {
    %c0_i32 = arith.constant 0 : i32
    %c0_i32_0 = arith.constant 0 : i32
    return %arg0, %c0_i32 : i32, i32
  }
}

</mosaic_0001>

<llo_original>
// kernel: _film_forward.1
$region0: #{_film_forward.1}
  #allocation0 [shape = 'u32[]', space=smem, size = 0x4, offset = 0x4, fixed_abs, tag = 'smem constant byte address 0x4 - core index']
  #allocation1 [shape = 'u32[144,128]{1,0:T(1,128)}', space=vmem, size = 0x12000, scoped, tag = 'internal scratch']
  %s0 = inlined_call_operand.vmem [shape: f32[8,256], index: 0, kind: input, shape index: {}]
  %s1 = inlined_call_operand.vmem [shape: f32[8,1], index: 1, kind: input, shape index: {}]
  %s2 = inlined_call_operand.vmem [shape: f32[8,1], index: 2, kind: input, shape index: {}]
  %s3 = inlined_call_operand.vmem [shape: f32[8,256], index: 3, kind: output, shape index: {}]
  %s4 = sld [smem:[#allocation0]]
  $region22: #{_film_forward.1} parent=0
    _
  %s6 = ssub.s32 1, %s4
  %s7 = scalar_select 0, %s6, %s4
  // Predicated region
  $region2: #{_film_forward.1} parent=0 // pred_check
    _
  $region3: #{_film_forward.1} parent=0 // pred_check_branch
    %9 = sbr.rel (0) target = $region5
  $region4: #{_film_forward.1} parent=0 // pred_region
    _
  $region5: #{_film_forward.1} parent=0 // pred_fallthru
    _
  // Predicated region
  $region6: #{_film_forward.1} parent=0 // pred_check
    _
  $region7: #{_film_forward.1} parent=0 // pred_check_branch
    %11 = sbr.rel (0) target = $region9
  $region8: #{_film_forward.1} parent=0 // pred_region
    _
  $region9: #{_film_forward.1} parent=0 // pred_fallthru
    _
  // Predicated region
  $region10: #{_film_forward.1} parent=0 // pred_check
    _
  $region11: #{_film_forward.1} parent=0 // pred_check_branch
    %13 = sbr.rel (0) target = $region13
  $region12: #{_film_forward.1} parent=0 // pred_region
    _
  $region13: #{_film_forward.1} parent=0 // pred_fallthru
    _
  %v14 = vld [vmem:[%s0] sm:$0xff]
  %v15 = vld [vmem:[%s0 + $0x8] sm:$0xff]
  %v16 = vadd.f32 %v14, %v15
  %17 = vadd.xlane.f32.xlu0 %v16
  %v18 = vpop.xlane.xlu0 %17
  %v19 = vmul.f32 %v18, 0.00390625
  %v20 = vsub.f32 %v14, %v19
  %v21 = vsub.f32 %v15, %v19
  %v22 = vmul.f32 %v20, %v20
  %v23 = vmul.f32 %v21, %v21
  %v24 = vadd.f32 %v22, %v23
  %25 = vadd.xlane.f32.xlu0 %v24
  %v26 = vpop.xlane.xlu0 %25
  %v27 = vmul.f32 %v26, 0.00390625
  %v28 = vld [vmem:[%s1] sm:$0xff]
  %v29 = vadd.f32 %v27, 1e-05
  %v30 = vrsqrt.pop %v29
  %v31 = vmul.f32 %v28, %v30
  %33 = vset.pattern.permute.xlu0 0
  %34 = vperm.xlu0 %33, %v31
  %v35 = vpop.permute.xlu0 %34
  %v37 = vmul.f32 %v20, %v35
  %v38 = vmul.f32 %v21, %v35
  %v39 = vld [vmem:[%s2] sm:$0xff]
  %41 = vset.pattern.permute.xlu0 0
  %42 = vperm.xlu0 %41, %v39
  %v43 = vpop.permute.xlu0 %42
  %v45 = vadd.f32 %v37, %v43
  %v46 = vadd.f32 %v38, %v43
  %47 = vst [vmem:[%s3] sm:$0xff] %v45
  %48 = vst [vmem:[%s3 + $0x8] sm:$0xff] %v46
  // Predicated region
  $region14: #{_film_forward.1} parent=0 // pred_check
    _
  $region15: #{_film_forward.1} parent=0 // pred_check_branch
    %50 = sbr.rel (0) target = $region17
  $region16: #{_film_forward.1} parent=0 // pred_region
    _
  $region17: #{_film_forward.1} parent=0 // pred_fallthru
    _
  // Predicated region
  $region18: #{_film_forward.1} parent=0 // pred_check
    _
  $region19: #{_film_forward.1} parent=0 // pred_check_branch
    %52 = sbr.rel (0) target = $region21
  $region20: #{_film_forward.1} parent=0 // pred_region
    _
  $region21: #{_film_forward.1} parent=0 // pred_fallthru
    _

</llo_original>
